<compile_context>
chip_gen: v7x
topology: tpu7x:2x2x1
jax: 0.10.0
libtpu: 0.0.40
codegen_flags: <defaults>
</compile_context>

<pallas_src>
import jax
import jax.numpy as jnp
from jax.experimental import pallas as pl
from jax.experimental.pallas import tpu as pltpu


def _round_up(x, m):
    return ((x + m - 1) // m) * m


def _cdiv(a, b):
    return -(-a // b)


# Optional features that failed to lower/compile on the current chip are remembered
# here so later calls skip straight to the configuration that works.
_RUNTIME_DISABLED = set()


def _prefer_core_parallel():
    """True iff the device visibly exposes >1 TensorCore (v7x-style)."""
    try:
        dev = jax.devices()[0]
        n = getattr(dev, "num_cores", None)
        kind = str(getattr(dev, "device_kind", "")).lower()
        return bool(n and n > 1) or ("v7" in kind)
    except Exception:
        return False


def _make_kernel(lane_dense):
    def mlp_kernel(x_ref,
                   w1_ref, b1_ref,
                   w2_ref, b2_ref,
                   w3_ref, b3_ref,
                   w4_ref, b4_ref,
                   o_ref):
        """One batch tile of the fused MLP: (Linear -> ReLU) x3 -> Linear.

        Matmul operands use the weights' dtype (f32 or bf16); accumulation, bias add
        and ReLU stay in f32.
        """
        cdt = w1_ref.dtype
        h = x_ref[...]
        h = jnp.dot(h.astype(cdt), w1_ref[...],
                    preferred_element_type=jnp.float32) + b1_ref[...]
        h = jnp.maximum(h, 0.0)
        h = jnp.dot(h.astype(cdt), w2_ref[...],
                    preferred_element_type=jnp.float32) + b2_ref[...]
        h = jnp.maximum(h, 0.0)
        h = jnp.dot(h.astype(cdt), w3_ref[...],
                    preferred_element_type=jnp.float32) + b3_ref[...]
        h = jnp.maximum(h, 0.0)
        y = jnp.dot(h.astype(cdt), w4_ref[...],
                    preferred_element_type=jnp.float32) + b4_ref[...]
        y = y.astype(o_ref.dtype)
        if lane_dense:
            # Row-major fold of `fold` consecutive batch rows into one 128-lane row so
            # the final store is an unmasked, lane-dense vst instead of masked vst.msk
            # (out_dim=16 uses only 16/128 lanes). The wrapper un-folds for free.
            y = y.reshape(o_ref.shape)
        o_ref[...] = y
    return mlp_kernel


def mlp_forward(x, params, *, tile_b=4096, compute_dtype=jnp.bfloat16, lane_dense=True):
    """x: (B, dim) float32. params: list of (W, b) with W as (in, out), b as (1, out).

    Batch-tiled, fully fused MLP (no HBM round trips for activations). Weights and
    biases are held resident in VMEM across batch tiles; only x/o tiles are streamed.
    Returns float32 (B, out_dim), matching the PyTorch module's forward.
    """
    B, dim = x.shape
    out_dim = params[-1][0].shape[1]

    # --- Batch tiling: big tiles (amortize per-step overhead), minimal pad waste. ---
    # Pick the number of tiles first, then the smallest 64-row-multiple tile covering B.
    # (64 = 8 sublanes * 8-row lane-fold, keeps the folded out block (8,128)-aligned.)
    tile_cap = max(64, _round_up(tile_b, 64))
    num_tiles = max(1, _cdiv(B, tile_cap))
    tile = _round_up(_cdiv(B, num_tiles), 64)
    padded_b = num_tiles * tile
    if padded_b != B:
        x = jnp.pad(x, ((0, padded_b - B), (0, 0)))
    x = x.astype(compute_dtype)

    # Inputs: streamed x tile + VMEM-resident weights/biases (constant index_maps).
    flat_args = [x]
    in_specs = [pl.BlockSpec((tile, dim), lambda i: (i, 0))]
    for w, b in params:
        flat_args += [w.astype(compute_dtype), b.astype(jnp.float32)]
        in_specs += [pl.BlockSpec(w.shape, lambda i: (0, 0)),
                     pl.BlockSpec(b.shape, lambda i: (0, 0))]

    flops = sum(2 * padded_b * w.shape[0] * w.shape[1] for w, _ in params)
    bytes_accessed = (sum(int(a.size) * a.dtype.itemsize for a in flat_args)
                      + padded_b * out_dim * 4)

    # Lane-dense output fold factor: fold rows * out_dim == 128 lanes.
    fold = 128 // out_dim if (0 < out_dim <= 128 and 128 % out_dim == 0) else 0
    want_lane = (bool(lane_dense) and fold > 1 and tile % (8 * fold) == 0
                 and "lane_dense" not in _RUNTIME_DISABLED)
    want_cp = _prefer_core_parallel() and "core_parallel" not in _RUNTIME_DISABLED

    def build_and_run(use_lane, use_cp):
        if use_lane:
            out_rows, out_cols = padded_b // fold, out_dim * fold      # (B/8, 128)
            out_block = (tile // fold, out_cols)
        else:
            out_rows, out_cols = padded_b, out_dim
            out_block = (tile, out_dim)
        sem = (pltpu.CORE_PARALLEL,) if use_cp else ("parallel",)
        out = pl.pallas_call(
            _make_kernel(use_lane),
            out_shape=jax.ShapeDtypeStruct((out_rows, out_cols), jnp.float32),
            grid=(num_tiles,),
            in_specs=in_specs,
            out_specs=pl.BlockSpec(out_block, lambda i: (i, 0)),
            compiler_params=pltpu.CompilerParams(dimension_semantics=sem),
            cost_estimate=pl.CostEstimate(flops=flops,
                                          bytes_accessed=bytes_accessed,
                                          transcendentals=0),
        )(*flat_args)
        return jax.block_until_ready(out)

    # Preference-ordered attempts; optional features degrade gracefully if the local
    # Mosaic rejects them (so the kernel always runs, on any TPU generation).
    attempts = []
    for cfg in ((want_lane, want_cp), (False, want_cp), (want_lane, False), (False, False)):
        if cfg not in attempts:
            attempts.append(cfg)

    last_err = None
    for idx, (use_lane, use_cp) in enumerate(attempts):
        try:
            out = build_and_run(use_lane, use_cp)
        except Exception as e:  # lowering/compile failure of an optional feature
            last_err = e
            continue
        if idx > 0:  # remember which optional feature had to be dropped
            if want_lane and not use_lane:
                _RUNTIME_DISABLED.add("lane_dense")
            if want_cp and not use_cp:
                _RUNTIME_DISABLED.add("core_parallel")
        if use_lane:
            out = out.reshape(padded_b, out_dim)  # free host-side un-fold (row-major)
        return out[:B] if padded_b != B else out
    raise last_err


def init_mlp_params(key, dim, out_dim, layer_widths):
    """Deterministic init mimicking torch.nn.Linear default U(-1/sqrt(fan_in), ...)."""
    sizes = [dim] + list(layer_widths) + [out_dim]
    params = []
    for i in range(len(sizes) - 1):
        fan_in, fan_out = sizes[i], sizes[i + 1]
        key, kw, kb = jax.random.split(key, 3)
        bound = 1.0 / jnp.sqrt(jnp.float32(fan_in))
        w = jax.random.uniform(kw, (fan_in, fan_out), jnp.float32, -bound, bound)
        b = jax.random.uniform(kb, (1, fan_out), jnp.float32, -bound, bound)
        params.append((w, b))
    return params


def mlp_reference(x, params):
    h = x
    for i, (w, b) in enumerate(params):
        h = h @ w + b
        if i < len(params) - 1:
            h = jnp.maximum(h, 0.0)
    return h


if __name__ == "__main__":
    # Module config: MLP(dim=32) -> out_dim = dim // 2 = 16, layer_widths=[64, 64, 64],
    # activation ReLU, dropout=0.0 (no-op), batch_norm=False.
    dim = 32
    out_dim = dim // 2
    layer_widths = [64, 64, 64]

    key = jax.random.PRNGKey(0)
    key, kx = jax.random.split(key)
    params = init_mlp_params(key, dim, out_dim, layer_widths)

    # 1) Small batch, exact f32 path: single grid step.
    x_small = jax.random.normal(kx, (8, dim), jnp.float32)
    y_small = jax.block_until_ready(
        mlp_forward(x_small, params, compute_dtype=jnp.float32))
    assert y_small.shape == (8, out_dim)
    assert jnp.allclose(y_small, mlp_reference(x_small, params), atol=1e-4, rtol=1e-4), \
        "small-batch mismatch vs reference"

    # 2) Larger, non-tile-multiple batch in f32: exercises multi-tile grid, resident
    #    weights, lane-dense output fold and the minimal-pad path (520 -> 576 rows).
    key, kx2 = jax.random.split(key)
    x_big = jax.random.normal(kx2, (520, dim), jnp.float32)
    y_big_ref = mlp_reference(x_big, params)
    y_big = jax.block_until_ready(
        mlp_forward(x_big, params, tile_b=256, compute_dtype=jnp.float32))
    assert y_big.shape == (520, out_dim)
    assert jnp.allclose(y_big, y_big_ref, atol=1e-4, rtol=1e-4), \
        "batch-tiled mismatch vs reference"

    # 3) Default path: bf16 matmul operands / streamed x (MXU-native everywhere),
    #    f32 accumulation, big default tile.
    y_bf16 = jax.block_until_ready(mlp_forward(x_big, params))
    max_err = jnp.max(jnp.abs(y_bf16 - y_big_ref))
    assert max_err < 5e-2, f"bf16 path error too large: {max_err}"

    print("KERNEL_OK")
</pallas_src>

<mosaic_0001>
module attributes {stable_mosaic.version = 11 : i64} {
  func.func @mlp_kernel(%arg0: i32, %arg1: memref<64x32xf32, #tpu.memory_space<vmem>>, %arg2: memref<32x64xf32, #tpu.memory_space<vmem>>, %arg3: memref<1x64xf32, #tpu.memory_space<vmem>>, %arg4: memref<64x64xf32, #tpu.memory_space<vmem>>, %arg5: memref<1x64xf32, #tpu.memory_space<vmem>>, %arg6: memref<64x64xf32, #tpu.memory_space<vmem>>, %arg7: memref<1x64xf32, #tpu.memory_space<vmem>>, %arg8: memref<64x16xf32, #tpu.memory_space<vmem>>, %arg9: memref<1x16xf32, #tpu.memory_space<vmem>>, %arg10: memref<8x128xf32, #tpu.memory_space<vmem>>) attributes {dimension_semantics = [#tpu.dimension_semantics<parallel>], iteration_bounds = array<i64: 1>, scalar_prefetch = 0 : i64, scratch_operands = 0 : i64, tpu.core_type = #tpu.core_type<tc>, window_params = [{transform_indices = @transform_0, window_bounds = array<i64: 64, 32>}, {pipeline_mode = #tpu.pipeline_mode<synchronous>, transform_indices = @transform_1, window_bounds = array<i64: 32, 64>}, {pipeline_mode = #tpu.pipeline_mode<synchronous>, transform_indices = @transform_2, window_bounds = array<i64: 1, 64>}, {pipeline_mode = #tpu.pipeline_mode<synchronous>, transform_indices = @transform_3, window_bounds = array<i64: 64, 64>}, {pipeline_mode = #tpu.pipeline_mode<synchronous>, transform_indices = @transform_4, window_bounds = array<i64: 1, 64>}, {pipeline_mode = #tpu.pipeline_mode<synchronous>, transform_indices = @transform_5, window_bounds = array<i64: 64, 64>}, {pipeline_mode = #tpu.pipeline_mode<synchronous>, transform_indices = @transform_6, window_bounds = array<i64: 1, 64>}, {pipeline_mode = #tpu.pipeline_mode<synchronous>, transform_indices = @transform_7, window_bounds = array<i64: 64, 16>}, {pipeline_mode = #tpu.pipeline_mode<synchronous>, transform_indices = @transform_8, window_bounds = array<i64: 1, 16>}, {transform_indices = @transform_9, window_bounds = array<i64: 8, 128>}]} {
    %c0 = arith.constant 0 : index
    %c0_0 = arith.constant 0 : index
    %0 = vector.load %arg1[%c0, %c0_0] : memref<64x32xf32, #tpu.memory_space<vmem>>, vector<64x32xf32>
    %c0_1 = arith.constant 0 : index
    %c0_2 = arith.constant 0 : index
    %1 = vector.load %arg2[%c0_1, %c0_2] : memref<32x64xf32, #tpu.memory_space<vmem>>, vector<32x64xf32>
    %cst = arith.constant dense<0.000000e+00> : vector<64x64xf32>
    %2 = tpu.matmul %0, %1, %cst {dimension_numbers = #tpu.dot_dimension_numbers<[1], [0], [0], [1], [0, 0, 1, 1], [], []>} : vector<64x32xf32>, vector<32x64xf32>, vector<64x64xf32> -> vector<64x64xf32>
    %c0_3 = arith.constant 0 : index
    %c0_4 = arith.constant 0 : index
    %3 = vector.load %arg3[%c0_3, %c0_4] : memref<1x64xf32, #tpu.memory_space<vmem>>, vector<1x64xf32>
    %4 = vector.broadcast %3 : vector<1x64xf32> to vector<64x64xf32>
    %5 = arith.addf %2, %4 : vector<64x64xf32>
    %cst_5 = arith.constant 0.000000e+00 : f32
    %6 = vector.broadcast %cst_5 : f32 to vector<64x64xf32>
    %7 = arith.maximumf %5, %6 : vector<64x64xf32>
    %c0_6 = arith.constant 0 : index
    %c0_7 = arith.constant 0 : index
    %8 = vector.load %arg4[%c0_6, %c0_7] : memref<64x64xf32, #tpu.memory_space<vmem>>, vector<64x64xf32>
    %cst_8 = arith.constant dense<0.000000e+00> : vector<64x64xf32>
    %9 = tpu.matmul %7, %8, %cst_8 {dimension_numbers = #tpu.dot_dimension_numbers<[1], [0], [0], [1], [0, 0, 1, 1], [], []>} : vector<64x64xf32>, vector<64x64xf32>, vector<64x64xf32> -> vector<64x64xf32>
    %c0_9 = arith.constant 0 : index
    %c0_10 = arith.constant 0 : index
    %10 = vector.load %arg5[%c0_9, %c0_10] : memref<1x64xf32, #tpu.memory_space<vmem>>, vector<1x64xf32>
    %11 = vector.broadcast %10 : vector<1x64xf32> to vector<64x64xf32>
    %12 = arith.addf %9, %11 : vector<64x64xf32>
    %cst_11 = arith.constant 0.000000e+00 : f32
    %13 = vector.broadcast %cst_11 : f32 to vector<64x64xf32>
    %14 = arith.maximumf %12, %13 : vector<64x64xf32>
    %c0_12 = arith.constant 0 : index
    %c0_13 = arith.constant 0 : index
    %15 = vector.load %arg6[%c0_12, %c0_13] : memref<64x64xf32, #tpu.memory_space<vmem>>, vector<64x64xf32>
    %cst_14 = arith.constant dense<0.000000e+00> : vector<64x64xf32>
    %16 = tpu.matmul %14, %15, %cst_14 {dimension_numbers = #tpu.dot_dimension_numbers<[1], [0], [0], [1], [0, 0, 1, 1], [], []>} : vector<64x64xf32>, vector<64x64xf32>, vector<64x64xf32> -> vector<64x64xf32>
    %c0_15 = arith.constant 0 : index
    %c0_16 = arith.constant 0 : index
    %17 = vector.load %arg7[%c0_15, %c0_16] : memref<1x64xf32, #tpu.memory_space<vmem>>, vector<1x64xf32>
    %18 = vector.broadcast %17 : vector<1x64xf32> to vector<64x64xf32>
    %19 = arith.addf %16, %18 : vector<64x64xf32>
    %cst_17 = arith.constant 0.000000e+00 : f32
    %20 = vector.broadcast %cst_17 : f32 to vector<64x64xf32>
    %21 = arith.maximumf %19, %20 : vector<64x64xf32>
    %c0_18 = arith.constant 0 : index
    %c0_19 = arith.constant 0 : index
    %22 = vector.load %arg8[%c0_18, %c0_19] : memref<64x16xf32, #tpu.memory_space<vmem>>, vector<64x16xf32>
    %cst_20 = arith.constant dense<0.000000e+00> : vector<64x16xf32>
    %23 = tpu.matmul %21, %22, %cst_20 {dimension_numbers = #tpu.dot_dimension_numbers<[1], [0], [0], [1], [0, 0, 1, 1], [], []>} : vector<64x64xf32>, vector<64x16xf32>, vector<64x16xf32> -> vector<64x16xf32>
    %c0_21 = arith.constant 0 : index
    %c0_22 = arith.constant 0 : index
    %24 = vector.load %arg9[%c0_21, %c0_22] : memref<1x16xf32, #tpu.memory_space<vmem>>, vector<1x16xf32>
    %25 = vector.broadcast %24 : vector<1x16xf32> to vector<64x16xf32>
    %26 = arith.addf %23, %25 : vector<64x16xf32>
    %27 = vector.shape_cast %26 : vector<64x16xf32> to vector<8x128xf32>
    %c0_23 = arith.constant 0 : index
    %c0_24 = arith.constant 0 : index
    %28 = vector.load %arg10[%c0_23, %c0_24] : memref<8x128xf32, #tpu.memory_space<vmem>>, vector<8x128xf32>
    tpu.vector_store %arg10[%c0_23, %c0_24], %27 {strides = array<i32>} : memref<8x128xf32, #tpu.memory_space<vmem>>, vector<8x128xf32>,
    return
  }
  func.func @transform_0(%arg0: i32) -> (i32, i32) {
    %c0_i32 = arith.constant 0 : i32
    %c0_i32_0 = arith.constant 0 : i32
    return %arg0, %c0_i32 : i32, i32
  }
  func.func @transform_1(%arg0: i32) -> (i32, i32) {
    %c0_i32 = arith.constant 0 : i32
    %c0_i32_0 = arith.constant 0 : i32
    %c0_i32_1 = arith.constant 0 : i32
    return %c0_i32, %c0_i32_0 : i32, i32
  }
  func.func @transform_2(%arg0: i32) -> (i32, i32) {
    %c0_i32 = arith.constant 0 : i32
    %c0_i32_0 = arith.constant 0 : i32
    %c0_i32_1 = arith.constant 0 : i32
    return %c0_i32, %c0_i32_0 : i32, i32
  }
  func.func @transform_3(%arg0: i32) -> (i32, i32) {
    %c0_i32 = arith.constant 0 : i32
    %c0_i32_0 = arith.constant 0 : i32
    %c0_i32_1 = arith.constant 0 : i32
    return %c0_i32, %c0_i32_0 : i32, i32
  }
  func.func @transform_4(%arg0: i32) -> (i32, i32) {
    %c0_i32 = arith.constant 0 : i32
    %c0_i32_0 = arith.constant 0 : i32
    %c0_i32_1 = arith.constant 0 : i32
    return %c0_i32, %c0_i32_0 : i32, i32
  }
  func.func @transform_5(%arg0: i32) -> (i32, i32) {
    %c0_i32 = arith.constant 0 : i32
    %c0_i32_0 = arith.constant 0 : i32
    %c0_i32_1 = arith.constant 0 : i32
    return %c0_i32, %c0_i32_0 : i32, i32
  }
  func.func @transform_6(%arg0: i32) -> (i32, i32) {
    %c0_i32 = arith.constant 0 : i32
    %c0_i32_0 = arith.constant 0 : i32
    %c0_i32_1 = arith.constant 0 : i32
    return %c0_i32, %c0_i32_0 : i32, i32
  }
  func.func @transform_7(%arg0: i32) -> (i32, i32) {
    %c0_i32 = arith.constant 0 : i32
    %c0_i32_0 = arith.constant 0 : i32
    %c0_i32_1 = arith.constant 0 : i32
    return %c0_i32, %c0_i32_0 : i32, i32
  }
  func.func @transform_8(%arg0: i32) -> (i32, i32) {
    %c0_i32 = arith.constant 0 : i32
    %c0_i32_0 = arith.constant 0 : i32
    %c0_i32_1 = arith.constant 0 : i32
    return %c0_i32, %c0_i32_0 : i32, i32
  }
  func.func @transform_9(%arg0: i32) -> (i32, i32) {
    %c0_i32 = arith.constant 0 : i32
    %c0_i32_0 = arith.constant 0 : i32
    return %arg0, %c0_i32 : i32, i32
  }
}

module attributes {stable_mosaic.version = 11 : i64} {
  func.func @mlp_kernel(%arg0: i32, %arg1: memref<64x32xf32, #tpu.memory_space<vmem>>, %arg2: memref<32x64xf32, #tpu.memory_space<vmem>>, %arg3: memref<1x64xf32, #tpu.memory_space<vmem>>, %arg4: memref<64x64xf32, #tpu.memory_space<vmem>>, %arg5: memref<1x64xf32, #tpu.memory_space<vmem>>, %arg6: memref<64x64xf32, #tpu.memory_space<vmem>>, %arg7: memref<1x64xf32, #tpu.memory_space<vmem>>, %arg8: memref<64x16xf32, #tpu.memory_space<vmem>>, %arg9: memref<1x16xf32, #tpu.memory_space<vmem>>, %arg10: memref<64x16xf32, #tpu.memory_space<vmem>>) attributes {dimension_semantics = [#tpu.dimension_semantics<parallel>], iteration_bounds = array<i64: 1>, scalar_prefetch = 0 : i64, scratch_operands = 0 : i64, tpu.core_type = #tpu.core_type<tc>, window_params = [{transform_indices = @transform_0, window_bounds = array<i64: 64, 32>}, {pipeline_mode = #tpu.pipeline_mode<synchronous>, transform_indices = @transform_1, window_bounds = array<i64: 32, 64>}, {pipeline_mode = #tpu.pipeline_mode<synchronous>, transform_indices = @transform_2, window_bounds = array<i64: 1, 64>}, {pipeline_mode = #tpu.pipeline_mode<synchronous>, transform_indices = @transform_3, window_bounds = array<i64: 64, 64>}, {pipeline_mode = #tpu.pipeline_mode<synchronous>, transform_indices = @transform_4, window_bounds = array<i64: 1, 64>}, {pipeline_mode = #tpu.pipeline_mode<synchronous>, transform_indices = @transform_5, window_bounds = array<i64: 64, 64>}, {pipeline_mode = #tpu.pipeline_mode<synchronous>, transform_indices = @transform_6, window_bounds = array<i64: 1, 64>}, {pipeline_mode = #tpu.pipeline_mode<synchronous>, transform_indices = @transform_7, window_bounds = array<i64: 64, 16>}, {pipeline_mode = #tpu.pipeline_mode<synchronous>, transform_indices = @transform_8, window_bounds = array<i64: 1, 16>}, {transform_indices = @transform_9, window_bounds = array<i64: 64, 16>}]} {
    %c0 = arith.constant 0 : index
    %c0_0 = arith.constant 0 : index
    %0 = vector.load %arg1[%c0, %c0_0] : memref<64x32xf32, #tpu.memory_space<vmem>>, vector<64x32xf32>
    %c0_1 = arith.constant 0 : index
    %c0_2 = arith.constant 0 : index
    %1 = vector.load %arg2[%c0_1, %c0_2] : memref<32x64xf32, #tpu.memory_space<vmem>>, vector<32x64xf32>
    %cst = arith.constant dense<0.000000e+00> : vector<64x64xf32>
    %2 = tpu.matmul %0, %1, %cst {dimension_numbers = #tpu.dot_dimension_numbers<[1], [0], [0], [1], [0, 0, 1, 1], [], []>} : vector<64x32xf32>, vector<32x64xf32>, vector<64x64xf32> -> vector<64x64xf32>
    %c0_3 = arith.constant 0 : index
    %c0_4 = arith.constant 0 : index
    %3 = vector.load %arg3[%c0_3, %c0_4] : memref<1x64xf32, #tpu.memory_space<vmem>>, vector<1x64xf32>
    %4 = vector.broadcast %3 : vector<1x64xf32> to vector<64x64xf32>
    %5 = arith.addf %2, %4 : vector<64x64xf32>
    %cst_5 = arith.constant 0.000000e+00 : f32
    %6 = vector.broadcast %cst_5 : f32 to vector<64x64xf32>
    %7 = arith.maximumf %5, %6 : vector<64x64xf32>
    %c0_6 = arith.constant 0 : index
    %c0_7 = arith.constant 0 : index
    %8 = vector.load %arg4[%c0_6, %c0_7] : memref<64x64xf32, #tpu.memory_space<vmem>>, vector<64x64xf32>
    %cst_8 = arith.constant dense<0.000000e+00> : vector<64x64xf32>
    %9 = tpu.matmul %7, %8, %cst_8 {dimension_numbers = #tpu.dot_dimension_numbers<[1], [0], [0], [1], [0, 0, 1, 1], [], []>} : vector<64x64xf32>, vector<64x64xf32>, vector<64x64xf32> -> vector<64x64xf32>
    %c0_9 = arith.constant 0 : index
    %c0_10 = arith.constant 0 : index
    %10 = vector.load %arg5[%c0_9, %c0_10] : memref<1x64xf32, #tpu.memory_space<vmem>>, vector<1x64xf32>
    %11 = vector.broadcast %10 : vector<1x64xf32> to vector<64x64xf32>
    %12 = arith.addf %9, %11 : vector<64x64xf32>
    %cst_11 = arith.constant 0.000000e+00 : f32
    %13 = vector.broadcast %cst_11 : f32 to vector<64x64xf32>
    %14 = arith.maximumf %12, %13 : vector<64x64xf32>
    %c0_12 = arith.constant 0 : index
    %c0_13 = arith.constant 0 : index
    %15 = vector.load %arg6[%c0_12, %c0_13] : memref<64x64xf32, #tpu.memory_space<vmem>>, vector<64x64xf32>
    %cst_14 = arith.constant dense<0.000000e+00> : vector<64x64xf32>
    %16 = tpu.matmul %14, %15, %cst_14 {dimension_numbers = #tpu.dot_dimension_numbers<[1], [0], [0], [1], [0, 0, 1, 1], [], []>} : vector<64x64xf32>, vector<64x64xf32>, vector<64x64xf32> -> vector<64x64xf32>
    %c0_15 = arith.constant 0 : index
    %c0_16 = arith.constant 0 : index
    %17 = vector.load %arg7[%c0_15, %c0_16] : memref<1x64xf32, #tpu.memory_space<vmem>>, vector<1x64xf32>
    %18 = vector.broadcast %17 : vector<1x64xf32> to vector<64x64xf32>
    %19 = arith.addf %16, %18 : vector<64x64xf32>
    %cst_17 = arith.constant 0.000000e+00 : f32
    %20 = vector.broadcast %cst_17 : f32 to vector<64x64xf32>
    %21 = arith.maximumf %19, %20 : vector<64x64xf32>
    %c0_18 = arith.constant 0 : index
    %c0_19 = arith.constant 0 : index
    %22 = vector.load %arg8[%c0_18, %c0_19] : memref<64x16xf32, #tpu.memory_space<vmem>>, vector<64x16xf32>
    %cst_20 = arith.constant dense<0.000000e+00> : vector<64x16xf32>
    %23 = tpu.matmul %21, %22, %cst_20 {dimension_numbers = #tpu.dot_dimension_numbers<[1], [0], [0], [1], [0, 0, 1, 1], [], []>} : vector<64x64xf32>, vector<64x16xf32>, vector<64x16xf32> -> vector<64x16xf32>
    %c0_21 = arith.constant 0 : index
    %c0_22 = arith.constant 0 : index
    %24 = vector.load %arg9[%c0_21, %c0_22] : memref<1x16xf32, #tpu.memory_space<vmem>>, vector<1x16xf32>
    %25 = vector.broadcast %24 : vector<1x16xf32> to vector<64x16xf32>
    %26 = arith.addf %23, %25 : vector<64x16xf32>
    %c0_23 = arith.constant 0 : index
    %c0_24 = arith.constant 0 : index
    %27 = vector.load %arg10[%c0_23, %c0_24] : memref<64x16xf32, #tpu.memory_space<vmem>>, vector<64x16xf32>
    tpu.vector_store %arg10[%c0_23, %c0_24], %26 {strides = array<i32>} : memref<64x16xf32, #tpu.memory_space<vmem>>, vector<64x16xf32>,
    return
  }
  func.func @transform_0(%arg0: i32) -> (i32, i32) {
    %c0_i32 = arith.constant 0 : i32
    %c0_i32_0 = arith.constant 0 : i32
    return %arg0, %c0_i32 : i32, i32
  }
  func.func @transform_1(%arg0: i32) -> (i32, i32) {
    %c0_i32 = arith.constant 0 : i32
    %c0_i32_0 = arith.constant 0 : i32
    %c0_i32_1 = arith.constant 0 : i32
    return %c0_i32, %c0_i32_0 : i32, i32
  }
  func.func @transform_2(%arg0: i32) -> (i32, i32) {
    %c0_i32 = arith.constant 0 : i32
    %c0_i32_0 = arith.constant 0 : i32
    %c0_i32_1 = arith.constant 0 : i32
    return %c0_i32, %c0_i32_0 : i32, i32
  }
  func.func @transform_3(%arg0: i32) -> (i32, i32) {
    %c0_i32 = arith.constant 0 : i32
    %c0_i32_0 = arith.constant 0 : i32
    %c0_i32_1 = arith.constant 0 : i32
    return %c0_i32, %c0_i32_0 : i32, i32
  }
  func.func @transform_4(%arg0: i32) -> (i32, i32) {
    %c0_i32 = arith.constant 0 : i32
    %c0_i32_0 = arith.constant 0 : i32
    %c0_i32_1 = arith.constant 0 : i32
    return %c0_i32, %c0_i32_0 : i32, i32
  }
  func.func @transform_5(%arg0: i32) -> (i32, i32) {
    %c0_i32 = arith.constant 0 : i32
    %c0_i32_0 = arith.constant 0 : i32
    %c0_i32_1 = arith.constant 0 : i32
    return %c0_i32, %c0_i32_0 : i32, i32
  }
  func.func @transform_6(%arg0: i32) -> (i32, i32) {
    %c0_i32 = arith.constant 0 : i32
    %c0_i32_0 = arith.constant 0 : i32
    %c0_i32_1 = arith.constant 0 : i32
    return %c0_i32, %c0_i32_0 : i32, i32
  }
  func.func @transform_7(%arg0: i32) -> (i32, i32) {
    %c0_i32 = arith.constant 0 : i32
    %c0_i32_0 = arith.constant 0 : i32
    %c0_i32_1 = arith.constant 0 : i32
    return %c0_i32, %c0_i32_0 : i32, i32
  }
  func.func @transform_8(%arg0: i32) -> (i32, i32) {
    %c0_i32 = arith.constant 0 : i32
    %c0_i32_0 = arith.constant 0 : i32
    %c0_i32_1 = arith.constant 0 : i32
    return %c0_i32, %c0_i32_0 : i32, i32
  }
  func.func @transform_9(%arg0: i32) -> (i32, i32) {
    %c0_i32 = arith.constant 0 : i32
    %c0_i32_0 = arith.constant 0 : i32
    return %arg0, %c0_i32 : i32, i32
  }
}

</mosaic_0001>

<llo_original>
// kernel: tpu_custom_call.1
$region0: #{tpu_custom_call.1}
  #allocation0 [shape = 'u32[]', space=smem, size = 0x4, offset = 0x4, fixed_abs, tag = 'smem constant byte address 0x4 - core index']
  #allocation1 [shape = 'u32[144,128]{1,0:T(1,128)}', space=vmem, size = 0x12000, scoped, tag = 'internal scratch']
  %s0 = inlined_call_operand.vmem [shape: f32[64,32], index: 0, kind: input, shape index: {}]
  %s1 = inlined_call_operand.vmem [shape: f32[32,64], index: 1, kind: input, shape index: {}]
  %s2 = inlined_call_operand.vmem [shape: f32[1,64], index: 2, kind: input, shape index: {}]
  %s3 = inlined_call_operand.vmem [shape: f32[64,64], index: 3, kind: input, shape index: {}]
  %s4 = inlined_call_operand.vmem [shape: f32[1,64], index: 4, kind: input, shape index: {}]
  %s5 = inlined_call_operand.vmem [shape: f32[64,64], index: 5, kind: input, shape index: {}]
  %s6 = inlined_call_operand.vmem [shape: f32[1,64], index: 6, kind: input, shape index: {}]
  %s7 = inlined_call_operand.vmem [shape: f32[64,16], index: 7, kind: input, shape index: {}]
  %s8 = inlined_call_operand.vmem [shape: f32[1,16], index: 8, kind: input, shape index: {}]
  %s9 = inlined_call_operand.vmem [shape: f32[64,16], index: 9, kind: output, shape index: {}]
  %s10 = sld [smem:[#allocation0]]
  $region46: #{tpu_custom_call.1} parent=0
    _
  %s12 = ssub.s32 1, %s10
  %s13 = scalar_select 0, %s12, %s10
  // Predicated region
  $region2: #{tpu_custom_call.1} parent=0 // pred_check
    _
  $region3: #{tpu_custom_call.1} parent=0 // pred_check_branch
    %15 = sbr.rel (0) target = $region5
  $region4: #{tpu_custom_call.1} parent=0 // pred_region
    _
  $region5: #{tpu_custom_call.1} parent=0 // pred_fallthru
    _
  // Predicated region
  $region6: #{tpu_custom_call.1} parent=0 // pred_check
    _
  $region7: #{tpu_custom_call.1} parent=0 // pred_check_branch
    %17 = sbr.rel (0) target = $region9
  $region8: #{tpu_custom_call.1} parent=0 // pred_region
    _
  $region9: #{tpu_custom_call.1} parent=0 // pred_fallthru
    _
  // Predicated region
  $region10: #{tpu_custom_call.1} parent=0 // pred_check
    _
  $region11: #{tpu_custom_call.1} parent=0 // pred_check_branch
    %19 = sbr.rel (0) target = $region13
  $region12: #{tpu_custom_call.1} parent=0 // pred_region
    _
  $region13: #{tpu_custom_call.1} parent=0 // pred_fallthru
    _
  // Predicated region
  $region14: #{tpu_custom_call.1} parent=0 // pred_check
    _
  $region15: #{tpu_custom_call.1} parent=0 // pred_check_branch
    %21 = sbr.rel (0) target = $region17
  $region16: #{tpu_custom_call.1} parent=0 // pred_region
    _
  $region17: #{tpu_custom_call.1} parent=0 // pred_fallthru
    _
  // Predicated region
  $region18: #{tpu_custom_call.1} parent=0 // pred_check
    _
  $region19: #{tpu_custom_call.1} parent=0 // pred_check_branch
    %23 = sbr.rel (0) target = $region21
  $region20: #{tpu_custom_call.1} parent=0 // pred_region
    _
  $region21: #{tpu_custom_call.1} parent=0 // pred_fallthru
    _
  // Predicated region
  $region22: #{tpu_custom_call.1} parent=0 // pred_check
    _
  $region23: #{tpu_custom_call.1} parent=0 // pred_check_branch
    %25 = sbr.rel (0) target = $region25
  $region24: #{tpu_custom_call.1} parent=0 // pred_region
    _
  $region25: #{tpu_custom_call.1} parent=0 // pred_fallthru
    _
  // Predicated region
  $region26: #{tpu_custom_call.1} parent=0 // pred_check
    _
  $region27: #{tpu_custom_call.1} parent=0 // pred_check_branch
    %27 = sbr.rel (0) target = $region29
  $region28: #{tpu_custom_call.1} parent=0 // pred_region
    _
  $region29: #{tpu_custom_call.1} parent=0 // pred_fallthru
    _
  // Predicated region
  $region30: #{tpu_custom_call.1} parent=0 // pred_check
    _
  $region31: #{tpu_custom_call.1} parent=0 // pred_check_branch
    %29 = sbr.rel (0) target = $region33
  $region32: #{tpu_custom_call.1} parent=0 // pred_region
    _
  $region33: #{tpu_custom_call.1} parent=0 // pred_fallthru
    _
  // Predicated region
  $region34: #{tpu_custom_call.1} parent=0 // pred_check
    _
  $region35: #{tpu_custom_call.1} parent=0 // pred_check_branch
    %31 = sbr.rel (0) target = $region37
  $region36: #{tpu_custom_call.1} parent=0 // pred_region
    _
  $region37: #{tpu_custom_call.1} parent=0 // pred_fallthru
    _
  %v32 = vld [vmem:[%s0] sm:$0xff]
  %v33 = vld [vmem:[%s0 + $0x8] sm:$0xff]
  %v34 = vld [vmem:[%s0 + $0x10] sm:$0xff]
  %v35 = vld [vmem:[%s0 + $0x18] sm:$0xff]
  %v36 = vld [vmem:[%s0 + $0x20] sm:$0xff]
  %v37 = vld [vmem:[%s0 + $0x28] sm:$0xff]
  %v38 = vld [vmem:[%s0 + $0x30] sm:$0xff]
  %v39 = vld [vmem:[%s0 + $0x38] sm:$0xff]
  %v40 = vld [vmem:[%s1] sm:$0xff]
  %v41 = vld [vmem:[%s1 + $0x8] sm:$0xff]
  %v42 = vld [vmem:[%s1 + $0x10] sm:$0xff]
  %v43 = vld [vmem:[%s1 + $0x18] sm:$0xff]
  %v44 = vld [vmem:[%s2] sm:$0x1]
  %v46 = vlaneseq
  %v47 = vshrl.u32 %v46, 7
  %v48 = vsub.s32 0, %v47
  %v49 = vrot.slane %v44, %v48
  %vm51 = vcmask 261120
  %v53 = vsel %vm51, %v32, 0
  %v56 = vsel %vm51, %v33, 0
  %v59 = vsel %vm51, %v34, 0
  %v62 = vsel %vm51, %v35, 0
  %v65 = vsel %vm51, %v36, 0
  %v68 = vsel %vm51, %v37, 0
  %v71 = vsel %vm51, %v38, 0
  %v74 = vsel %vm51, %v39, 0
  %76 = vmatprep.subr.mxu0 0.0
  %77 = vmatpush1.msra.mxu0 %v40
  %78 = vmatprep.subr.mxu0 0.0
  %79 = vmatpush1.msra.mxu0 %v41
  %80 = vmatprep.subr.mxu0 0.0
  %81 = vmatpush1.msra.mxu0 %v42
  %82 = vmatprep.subr.mxu0 0.0
  %83 = vmatpush1.msra.mxu0 %v43
  %84 = vmatprep.subr.mxu0 0.0
  %85 = vmatpush1.msra.mxu0 0.0
  %86 = vmatprep.subr.mxu0 0.0
  %87 = vmatpush1.msra.mxu0 0.0
  %88 = vmatprep.subr.mxu0 0.0
  %89 = vmatpush1.msra.mxu0 0.0
  %90 = vmatprep.subr.mxu0 0.0
  %91 = vmatpush1.msra.mxu0 0.0
  %92 = vmatprep.subr.mxu0 0.0
  %93 = vmatpush1.msra.mxu0 0.0
  %94 = vmatprep.subr.mxu0 0.0
  %95 = vmatpush1.msra.mxu0 0.0
  %96 = vmatprep.subr.mxu0 0.0
  %97 = vmatpush1.msra.mxu0 0.0
  %98 = vmatprep.subr.mxu0 0.0
  %99 = vmatpush1.msra.mxu0 0.0
  %100 = vmatprep.subr.mxu0 0.0
  %101 = vmatpush1.msra.mxu0 0.0
  %102 = vmatprep.subr.mxu0 0.0
  %103 = vmatpush1.msra.mxu0 0.0
  %104 = vmatprep.subr.mxu0 0.0
  %105 = vmatpush1.msra.mxu0 0.0
  %106 = vmatprep.subr.mxu0 0.0
  %107 = vmatpush1.msra.mxu0 0.0
  %108 = vmatprep.subr.mxu0 0.0
  %109 = vmatpush1.msra.mxu0 0.0
  %110 = vmatprep.subr.mxu0 0.0
  %111 = vmatpush1.msra.mxu0 0.0
  %112 = vmatprep.subr.mxu0 0.0
  %113 = vmatpush1.msra.mxu0 0.0
  %114 = vmatprep.subr.mxu0 0.0
  %115 = vmatpush1.msra.mxu0 0.0
  %116 = vmatprep.subr.mxu0 0.0
  %117 = vmatpush1.msra.mxu0 0.0
  %118 = vmatprep.subr.mxu0 0.0
  %119 = vmatpush1.msra.mxu0 0.0
  %120 = vmatprep.subr.mxu0 0.0
  %121 = vmatpush1.msra.mxu0 0.0
  %122 = vmatprep.subr.mxu0 0.0
  %123 = vmatpush1.msra.mxu0 0.0
  %124 = vmatprep.subr.mxu0 0.0
  %125 = vmatpush1.msra.mxu0 0.0
  %126 = vmatprep.subr.mxu0 0.0
  %127 = vmatpush1.msra.mxu0 0.0
  %128 = vmatprep.subr.mxu0 0.0
  %129 = vmatpush1.msra.mxu0 0.0
  %130 = vmatprep.subr.mxu0 0.0
  %131 = vmatpush1.msra.mxu0 0.0
  %132 = vmatprep.subr.mxu0 0.0
  %133 = vmatpush1.msra.mxu0 0.0
  %134 = vmatprep.subr.mxu0 0.0
  %135 = vmatpush1.msra.mxu0 0.0
  %136 = vmatprep.subr.mxu0 0.0
  %137 = vmatpush1.msra.mxu0 0.0
  %138 = vmatprep.subr.mxu0 0.0
  %139 = vmatpush1.msra.mxu0 0.0
  %140 = vmatprep.mubr.f32.mxu0 0.0
  %141 = vmatmul.mubr.f32.gmra.mrb[0].mxu0 %v53
  %v142 = vpop.f32.mrb[0].mxu0
  %v143 = vadd.f32 %v49, %v142
  %v144 = vpop.f32.mrb[0].mxu0
  %145 = vmatprep.mubr.f32.mxu0 0.0
  %146 = vmatmul.mubr.f32.gmra.mrb[0].mxu0 %v56
  %v147 = vpop.f32.mrb[0].mxu0
  %v148 = vadd.f32 %v49, %v147
  %v149 = vpop.f32.mrb[0].mxu0
  %150 = vmatprep.mubr.f32.mxu0 0.0
  %151 = vmatmul.mubr.f32.gmra.mrb[0].mxu0 %v59
  %v152 = vpop.f32.mrb[0].mxu0
  %v153 = vadd.f32 %v49, %v152
  %v154 = vpop.f32.mrb[0].mxu0
  %155 = vmatprep.mubr.f32.mxu0 0.0
  %156 = vmatmul.mubr.f32.gmra.mrb[0].mxu0 %v62
  %v157 = vpop.f32.mrb[0].mxu0
  %v158 = vadd.f32 %v49, %v157
  %v159 = vpop.f32.mrb[0].mxu0
  %160 = vmatprep.mubr.f32.mxu0 0.0
  %161 = vmatmul.mubr.f32.gmra.mrb[0].mxu0 %v65
  %v162 = vpop.f32.mrb[0].mxu0
  %v163 = vadd.f32 %v49, %v162
  %v164 = vpop.f32.mrb[0].mxu0
  %165 = vmatprep.mubr.f32.mxu0 0.0
  %166 = vmatmul.mubr.f32.gmra.mrb[0].mxu0 %v68
  %v167 = vpop.f32.mrb[0].mxu0
  %v168 = vadd.f32 %v49, %v167
  %v169 = vpop.f32.mrb[0].mxu0
  %170 = vmatprep.mubr.f32.mxu0 0.0
  %171 = vmatmul.mubr.f32.gmra.mrb[0].mxu0 %v71
  %v172 = vpop.f32.mrb[0].mxu0
  %v173 = vadd.f32 %v49, %v172
  %v174 = vpop.f32.mrb[0].mxu0
  %175 = vmatprep.mubr.f32.mxu0 0.0
  %176 = vmatmul.mubr.f32.gmra.mrb[0].mxu0 %v74
  %v177 = vpop.f32.mrb[0].mxu0
  %v178 = vadd.f32 %v49, %v177
  %v179 = vpop.f32.mrb[0].mxu0
  %180 = vdwg.mxu0
  %v181 = vmax.f32 %v143, 0.0
  %v182 = vmax.f32 %v148, 0.0
  %v183 = vmax.f32 %v153, 0.0
  %v184 = vmax.f32 %v158, 0.0
  %v185 = vmax.f32 %v163, 0.0
  %v186 = vmax.f32 %v168, 0.0
  %v187 = vmax.f32 %v173, 0.0
  %v188 = vmax.f32 %v178, 0.0
  %v189 = vld [vmem:[%s3] sm:$0xff]
  %v190 = vld [vmem:[%s3 + $0x8] sm:$0xff]
  %v191 = vld [vmem:[%s3 + $0x10] sm:$0xff]
  %v192 = vld [vmem:[%s3 + $0x18] sm:$0xff]
  %v193 = vld [vmem:[%s3 + $0x20] sm:$0xff]
  %v194 = vld [vmem:[%s3 + $0x28] sm:$0xff]
  %v195 = vld [vmem:[%s3 + $0x30] sm:$0xff]
  %v196 = vld [vmem:[%s3 + $0x38] sm:$0xff]
  %v197 = vld [vmem:[%s4] sm:$0x1]
  %v199 = vlaneseq
  %v200 = vshrl.u32 %v199, 7
  %v201 = vsub.s32 0, %v200
  %v202 = vrot.slane %v197, %v201
  %vm204 = vcmask 523264
  %v206 = vsel %vm204, %v181, 0
  %v209 = vsel %vm204, %v182, 0
  %v212 = vsel %vm204, %v183, 0
  %v215 = vsel %vm204, %v184, 0
  %v218 = vsel %vm204, %v185, 0
  %v221 = vsel %vm204, %v186, 0
  %v224 = vsel %vm204, %v187, 0
  %v227 = vsel %vm204, %v188, 0
  %229 = vmatprep.subr.mxu0 0.0
  %230 = vmatpush1.msra.mxu0 %v189
  %231 = vmatprep.subr.mxu0 0.0
  %232 = vmatpush1.msra.mxu0 %v190
  %233 = vmatprep.subr.mxu0 0.0
  %234 = vmatpush1.msra.mxu0 %v191
  %235 = vmatprep.subr.mxu0 0.0
  %236 = vmatpush1.msra.mxu0 %v192
  %237 = vmatprep.subr.mxu0 0.0
  %238 = vmatpush1.msra.mxu0 %v193
  %239 = vmatprep.subr.mxu0 0.0
  %240 = vmatpush1.msra.mxu0 %v194
  %241 = vmatprep.subr.mxu0 0.0
  %242 = vmatpush1.msra.mxu0 %v195
  %243 = vmatprep.subr.mxu0 0.0
  %244 = vmatpush1.msra.mxu0 %v196
  %245 = vmatprep.subr.mxu0 0.0
  %246 = vmatpush1.msra.mxu0 0.0
  %247 = vmatprep.subr.mxu0 0.0
  %248 = vmatpush1.msra.mxu0 0.0
  %249 = vmatprep.subr.mxu0 0.0
  %250 = vmatpush1.msra.mxu0 0.0
  %251 = vmatprep.subr.mxu0 0.0
  %252 = vmatpush1.msra.mxu0 0.0
  %253 = vmatprep.subr.mxu0 0.0
  %254 = vmatpush1.msra.mxu0 0.0
  %255 = vmatprep.subr.mxu0 0.0
  %256 = vmatpush1.msra.mxu0 0.0
  %257 = vmatprep.subr.mxu0 0.0
  %258 = vmatpush1.msra.mxu0 0.0
  %259 = vmatprep.subr.mxu0 0.0
  %260 = vmatpush1.msra.mxu0 0.0
  %261 = vmatprep.subr.mxu0 0.0
  %262 = vmatpush1.msra.mxu0 0.0
  %263 = vmatprep.subr.mxu0 0.0
  %264 = vmatpush1.msra.mxu0 0.0
  %265 = vmatprep.subr.mxu0 0.0
  %266 = vmatpush1.msra.mxu0 0.0
  %267 = vmatprep.subr.mxu0 0.0
  %268 = vmatpush1.msra.mxu0 0.0
  %269 = vmatprep.subr.mxu0 0.0
  %270 = vmatpush1.msra.mxu0 0.0
  %271 = vmatprep.subr.mxu0 0.0
  %272 = vmatpush1.msra.mxu0 0.0
  %273 = vmatprep.subr.mxu0 0.0
  %274 = vmatpush1.msra.mxu0 0.0
  %275 = vmatprep.subr.mxu0 0.0
  %276 = vmatpush1.msra.mxu0 0.0
  %277 = vmatprep.subr.mxu0 0.0
  %278 = vmatpush1.msra.mxu0 0.0
  %279 = vmatprep.subr.mxu0 0.0
  %280 = vmatpush1.msra.mxu0 0.0
  %281 = vmatprep.subr.mxu0 0.0
  %282 = vmatpush1.msra.mxu0 0.0
  %283 = vmatprep.subr.mxu0 0.0
  %284 = vmatpush1.msra.mxu0 0.0
  %285 = vmatprep.subr.mxu0 0.0
  %286 = vmatpush1.msra.mxu0 0.0
  %287 = vmatprep.subr.mxu0 0.0
  %288 = vmatpush1.msra.mxu0 0.0
  %289 = vmatprep.subr.mxu0 0.0
  %290 = vmatpush1.msra.mxu0 0.0
  %291 = vmatprep.subr.mxu0 0.0
  %292 = vmatpush1.msra.mxu0 0.0
  %293 = vmatprep.mubr.f32.mxu0 0.0
  %294 = vmatmul.mubr.f32.gmra.mrb[0].mxu0 %v206
  %v295 = vpop.f32.mrb[0].mxu0
  %v296 = vadd.f32 %v202, %v295
  %v297 = vpop.f32.mrb[0].mxu0
  %298 = vmatprep.mubr.f32.mxu0 0.0
  %299 = vmatmul.mubr.f32.gmra.mrb[0].mxu0 %v209
  %v300 = vpop.f32.mrb[0].mxu0
  %v301 = vadd.f32 %v202, %v300
  %v302 = vpop.f32.mrb[0].mxu0
  %303 = vmatprep.mubr.f32.mxu0 0.0
  %304 = vmatmul.mubr.f32.gmra.mrb[0].mxu0 %v212
  %v305 = vpop.f32.mrb[0].mxu0
  %v306 = vadd.f32 %v202, %v305
  %v307 = vpop.f32.mrb[0].mxu0
  %308 = vmatprep.mubr.f32.mxu0 0.0
  %309 = vmatmul.mubr.f32.gmra.mrb[0].mxu0 %v215
  %v310 = vpop.f32.mrb[0].mxu0
  %v311 = vadd.f32 %v202, %v310
  %v312 = vpop.f32.mrb[0].mxu0
  %313 = vmatprep.mubr.f32.mxu0 0.0
  %314 = vmatmul.mubr.f32.gmra.mrb[0].mxu0 %v218
  %v315 = vpop.f32.mrb[0].mxu0
  %v316 = vadd.f32 %v202, %v315
  %v317 = vpop.f32.mrb[0].mxu0
  %318 = vmatprep.mubr.f32.mxu0 0.0
  %319 = vmatmul.mubr.f32.gmra.mrb[0].mxu0 %v221
  %v320 = vpop.f32.mrb[0].mxu0
  %v321 = vadd.f32 %v202, %v320
  %v322 = vpop.f32.mrb[0].mxu0
  %323 = vmatprep.mubr.f32.mxu0 0.0
  %324 = vmatmul.mubr.f32.gmra.mrb[0].mxu0 %v224
  %v325 = vpop.f32.mrb[0].mxu0
  %v326 = vadd.f32 %v202, %v325
  %v327 = vpop.f32.mrb[0].mxu0
  %328 = vmatprep.mubr.f32.mxu0 0.0
  %329 = vmatmul.mubr.f32.gmra.mrb[0].mxu0 %v227
  %v330 = vpop.f32.mrb[0].mxu0
  %v331 = vadd.f32 %v202, %v330
  %v332 = vpop.f32.mrb[0].mxu0
  %333 = vdwg.mxu0
  %v334 = vmax.f32 %v296, 0.0
  %v335 = vmax.f32 %v301, 0.0
  %v336 = vmax.f32 %v306, 0.0
  %v337 = vmax.f32 %v311, 0.0
  %v338 = vmax.f32 %v316, 0.0
  %v339 = vmax.f32 %v321, 0.0
  %v340 = vmax.f32 %v326, 0.0
  %v341 = vmax.f32 %v331, 0.0
  %v342 = vld [vmem:[%s5] sm:$0xff]
  %v343 = vld [vmem:[%s5 + $0x8] sm:$0xff]
  %v344 = vld [vmem:[%s5 + $0x10] sm:$0xff]
  %v345 = vld [vmem:[%s5 + $0x18] sm:$0xff]
  %v346 = vld [vmem:[%s5 + $0x20] sm:$0xff]
  %v347 = vld [vmem:[%s5 + $0x28] sm:$0xff]
  %v348 = vld [vmem:[%s5 + $0x30] sm:$0xff]
  %v349 = vld [vmem:[%s5 + $0x38] sm:$0xff]
  %v350 = vld [vmem:[%s6] sm:$0x1]
  %v352 = vlaneseq
  %v353 = vshrl.u32 %v352, 7
  %v354 = vsub.s32 0, %v353
  %v355 = vrot.slane %v350, %v354
  %v358 = vsel %vm204, %v334, 0
  %v361 = vsel %vm204, %v335, 0
  %v364 = vsel %vm204, %v336, 0
  %v367 = vsel %vm204, %v337, 0
  %v370 = vsel %vm204, %v338, 0
  %v373 = vsel %vm204, %v339, 0
  %v376 = vsel %vm204, %v340, 0
  %v379 = vsel %vm204, %v341, 0
  %381 = vmatprep.subr.mxu0 0.0
  %382 = vmatpush1.msra.mxu0 %v342
  %383 = vmatprep.subr.mxu0 0.0
  %384 = vmatpush1.msra.mxu0 %v343
  %385 = vmatprep.subr.mxu0 0.0
  %386 = vmatpush1.msra.mxu0 %v344
  %387 = vmatprep.subr.mxu0 0.0
  %388 = vmatpush1.msra.mxu0 %v345
  %389 = vmatprep.subr.mxu0 0.0
  %390 = vmatpush1.msra.mxu0 %v346
  %391 = vmatprep.subr.mxu0 0.0
  %392 = vmatpush1.msra.mxu0 %v347
  %393 = vmatprep.subr.mxu0 0.0
  %394 = vmatpush1.msra.mxu0 %v348
  %395 = vmatprep.subr.mxu0 0.0
  %396 = vmatpush1.msra.mxu0 %v349
  %397 = vmatprep.subr.mxu0 0.0
  %398 = vmatpush1.msra.mxu0 0.0
  %399 = vmatprep.subr.mxu0 0.0
  %400 = vmatpush1.msra.mxu0 0.0
  %401 = vmatprep.subr.mxu0 0.0
  %402 = vmatpush1.msra.mxu0 0.0
  %403 = vmatprep.subr.mxu0 0.0
  %404 = vmatpush1.msra.mxu0 0.0
  %405 = vmatprep.subr.mxu0 0.0
  %406 = vmatpush1.msra.mxu0 0.0
  %407 = vmatprep.subr.mxu0 0.0
  %408 = vmatpush1.msra.mxu0 0.0
  %409 = vmatprep.subr.mxu0 0.0
  %410 = vmatpush1.msra.mxu0 0.0
  %411 = vmatprep.subr.mxu0 0.0
  %412 = vmatpush1.msra.mxu0 0.0
  %413 = vmatprep.subr.mxu0 0.0
  %414 = vmatpush1.msra.mxu0 0.0
  %415 = vmatprep.subr.mxu0 0.0
  %416 = vmatpush1.msra.mxu0 0.0
  %417 = vmatprep.subr.mxu0 0.0
  %418 = vmatpush1.msra.mxu0 0.0
  %419 = vmatprep.subr.mxu0 0.0
  %420 = vmatpush1.msra.mxu0 0.0
  %421 = vmatprep.subr.mxu0 0.0
  %422 = vmatpush1.msra.mxu0 0.0
  %423 = vmatprep.subr.mxu0 0.0
  %424 = vmatpush1.msra.mxu0 0.0
  %425 = vmatprep.subr.mxu0 0.0
  %426 = vmatpush1.msra.mxu0 0.0
  %427 = vmatprep.subr.mxu0 0.0
  %428 = vmatpush1.msra.mxu0 0.0
  %429 = vmatprep.subr.mxu0 0.0
  %430 = vmatpush1.msra.mxu0 0.0
  %431 = vmatprep.subr.mxu0 0.0
  %432 = vmatpush1.msra.mxu0 0.0
  %433 = vmatprep.subr.mxu0 0.0
  %434 = vmatpush1.msra.mxu0 0.0
  %435 = vmatprep.subr.mxu0 0.0
  %436 = vmatpush1.msra.mxu0 0.0
  %437 = vmatprep.subr.mxu0 0.0
  %438 = vmatpush1.msra.mxu0 0.0
  %439 = vmatprep.subr.mxu0 0.0
  %440 = vmatpush1.msra.mxu0 0.0
  %441 = vmatprep.subr.mxu0 0.0
  %442 = vmatpush1.msra.mxu0 0.0
  %443 = vmatprep.subr.mxu0 0.0
  %444 = vmatpush1.msra.mxu0 0.0
  %445 = vmatprep.mubr.f32.mxu0 0.0
  %446 = vmatmul.mubr.f32.gmra.mrb[0].mxu0 %v358
  %v447 = vpop.f32.mrb[0].mxu0
  %v448 = vadd.f32 %v355, %v447
  %v449 = vpop.f32.mrb[0].mxu0
  %450 = vmatprep.mubr.f32.mxu0 0.0
  %451 = vmatmul.mubr.f32.gmra.mrb[0].mxu0 %v361
  %v452 = vpop.f32.mrb[0].mxu0
  %v453 = vadd.f32 %v355, %v452
  %v454 = vpop.f32.mrb[0].mxu0
  %455 = vmatprep.mubr.f32.mxu0 0.0
  %456 = vmatmul.mubr.f32.gmra.mrb[0].mxu0 %v364
  %v457 = vpop.f32.mrb[0].mxu0
  %v458 = vadd.f32 %v355, %v457
  %v459 = vpop.f32.mrb[0].mxu0
  %460 = vmatprep.mubr.f32.mxu0 0.0
  %461 = vmatmul.mubr.f32.gmra.mrb[0].mxu0 %v367
  %v462 = vpop.f32.mrb[0].mxu0
  %v463 = vadd.f32 %v355, %v462
  %v464 = vpop.f32.mrb[0].mxu0
  %465 = vmatprep.mubr.f32.mxu0 0.0
  %466 = vmatmul.mubr.f32.gmra.mrb[0].mxu0 %v370
  %v467 = vpop.f32.mrb[0].mxu0
  %v468 = vadd.f32 %v355, %v467
  %v469 = vpop.f32.mrb[0].mxu0
  %470 = vmatprep.mubr.f32.mxu0 0.0
  %471 = vmatmul.mubr.f32.gmra.mrb[0].mxu0 %v373
  %v472 = vpop.f32.mrb[0].mxu0
  %v473 = vadd.f32 %v355, %v472
  %v474 = vpop.f32.mrb[0].mxu0
  %475 = vmatprep.mubr.f32.mxu0 0.0
  %476 = vmatmul.mubr.f32.gmra.mrb[0].mxu0 %v376
  %v477 = vpop.f32.mrb[0].mxu0
  %v478 = vadd.f32 %v355, %v477
  %v479 = vpop.f32.mrb[0].mxu0
  %480 = vmatprep.mubr.f32.mxu0 0.0
  %481 = vmatmul.mubr.f32.gmra.mrb[0].mxu0 %v379
  %v482 = vpop.f32.mrb[0].mxu0
  %v483 = vadd.f32 %v355, %v482
  %v484 = vpop.f32.mrb[0].mxu0
  %485 = vdwg.mxu0
  %v486 = vmax.f32 %v448, 0.0
  %v487 = vmax.f32 %v453, 0.0
  %v488 = vmax.f32 %v458, 0.0
  %v489 = vmax.f32 %v463, 0.0
  %v490 = vmax.f32 %v468, 0.0
  %v491 = vmax.f32 %v473, 0.0
  %v492 = vmax.f32 %v478, 0.0
  %v493 = vmax.f32 %v483, 0.0
  %v494 = vld [vmem:[%s7] sm:$0xff]
  %v495 = vld [vmem:[%s7 + $0x8] sm:$0xff]
  %v496 = vld [vmem:[%s7 + $0x10] sm:$0xff]
  %v497 = vld [vmem:[%s7 + $0x18] sm:$0xff]
  %v498 = vld [vmem:[%s7 + $0x20] sm:$0xff]
  %v499 = vld [vmem:[%s7 + $0x28] sm:$0xff]
  %v500 = vld [vmem:[%s7 + $0x30] sm:$0xff]
  %v501 = vld [vmem:[%s7 + $0x38] sm:$0xff]
  %v502 = vld [vmem:[%s8] sm:$0x1]
  %v504 = vlaneseq
  %v505 = vshrl.u32 %v504, 7
  %v506 = vsub.s32 0, %v505
  %v507 = vrot.slane %v502, %v506
  %v510 = vsel %vm204, %v486, 0
  %v513 = vsel %vm204, %v487, 0
  %v516 = vsel %vm204, %v488, 0
  %v519 = vsel %vm204, %v489, 0
  %v522 = vsel %vm204, %v490, 0
  %v525 = vsel %vm204, %v491, 0
  %v528 = vsel %vm204, %v492, 0
  %v531 = vsel %vm204, %v493, 0
  %533 = vmatprep.subr.mxu0 0.0
  %534 = vmatpush1.msra.mxu0 %v494
  %535 = vmatprep.subr.mxu0 0.0
  %536 = vmatpush1.msra.mxu0 %v495
  %537 = vmatprep.subr.mxu0 0.0
  %538 = vmatpush1.msra.mxu0 %v496
  %539 = vmatprep.subr.mxu0 0.0
  %540 = vmatpush1.msra.mxu0 %v497
  %541 = vmatprep.subr.mxu0 0.0
  %542 = vmatpush1.msra.mxu0 %v498
  %543 = vmatprep.subr.mxu0 0.0
  %544 = vmatpush1.msra.mxu0 %v499
  %545 = vmatprep.subr.mxu0 0.0
  %546 = vmatpush1.msra.mxu0 %v500
  %547 = vmatprep.subr.mxu0 0.0
  %548 = vmatpush1.msra.mxu0 %v501
  %549 = vmatprep.subr.mxu0 0.0
  %550 = vmatpush1.msra.mxu0 0.0
  %551 = vmatprep.subr.mxu0 0.0
  %552 = vmatpush1.msra.mxu0 0.0
  %553 = vmatprep.subr.mxu0 0.0
  %554 = vmatpush1.msra.mxu0 0.0
  %555 = vmatprep.subr.mxu0 0.0
  %556 = vmatpush1.msra.mxu0 0.0
  %557 = vmatprep.subr.mxu0 0.0
  %558 = vmatpush1.msra.mxu0 0.0
  %559 = vmatprep.subr.mxu0 0.0
  %560 = vmatpush1.msra.mxu0 0.0
  %561 = vmatprep.subr.mxu0 0.0
  %562 = vmatpush1.msra.mxu0 0.0
  %563 = vmatprep.subr.mxu0 0.0
  %564 = vmatpush1.msra.mxu0 0.0
  %565 = vmatprep.subr.mxu0 0.0
  %566 = vmatpush1.msra.mxu0 0.0
  %567 = vmatprep.subr.mxu0 0.0
  %568 = vmatpush1.msra.mxu0 0.0
  %569 = vmatprep.subr.mxu0 0.0
  %570 = vmatpush1.msra.mxu0 0.0
  %571 = vmatprep.subr.mxu0 0.0
  %572 = vmatpush1.msra.mxu0 0.0
  %573 = vmatprep.subr.mxu0 0.0
  %574 = vmatpush1.msra.mxu0 0.0
  %575 = vmatprep.subr.mxu0 0.0
  %576 = vmatpush1.msra.mxu0 0.0
  %577 = vmatprep.subr.mxu0 0.0
  %578 = vmatpush1.msra.mxu0 0.0
  %579 = vmatprep.subr.mxu0 0.0
  %580 = vmatpush1.msra.mxu0 0.0
  %581 = vmatprep.subr.mxu0 0.0
  %582 = vmatpush1.msra.mxu0 0.0
  %583 = vmatprep.subr.mxu0 0.0
  %584 = vmatpush1.msra.mxu0 0.0
  %585 = vmatprep.subr.mxu0 0.0
  %586 = vmatpush1.msra.mxu0 0.0
  %587 = vmatprep.subr.mxu0 0.0
  %588 = vmatpush1.msra.mxu0 0.0
  %589 = vmatprep.subr.mxu0 0.0
  %590 = vmatpush1.msra.mxu0 0.0
  %591 = vmatprep.subr.mxu0 0.0
  %592 = vmatpush1.msra.mxu0 0.0
  %593 = vmatprep.subr.mxu0 0.0
  %594 = vmatpush1.msra.mxu0 0.0
  %595 = vmatprep.subr.mxu0 0.0
  %596 = vmatpush1.msra.mxu0 0.0
  %597 = vmatprep.mubr.f32.mxu0 0.0
  %598 = vmatmul.mubr.f32.gmra.mrb[0].mxu0 %v510
  %v599 = vpop.f32.mrb[0].mxu0
  %v600 = vadd.f32 %v507, %v599
  %v601 = vpop.f32.mrb[0].mxu0
  %602 = vmatprep.mubr.f32.mxu0 0.0
  %603 = vmatmul.mubr.f32.gmra.mrb[0].mxu0 %v513
  %v604 = vpop.f32.mrb[0].mxu0
  %v605 = vadd.f32 %v507, %v604
  %v606 = vpop.f32.mrb[0].mxu0
  %607 = vmatprep.mubr.f32.mxu0 0.0
  %608 = vmatmul.mubr.f32.gmra.mrb[0].mxu0 %v516
  %v609 = vpop.f32.mrb[0].mxu0
  %v610 = vadd.f32 %v507, %v609
  %v611 = vpop.f32.mrb[0].mxu0
  %612 = vmatprep.mubr.f32.mxu0 0.0
  %613 = vmatmul.mubr.f32.gmra.mrb[0].mxu0 %v519
  %v614 = vpop.f32.mrb[0].mxu0
  %v615 = vadd.f32 %v507, %v614
  %v616 = vpop.f32.mrb[0].mxu0
  %617 = vmatprep.mubr.f32.mxu0 0.0
  %618 = vmatmul.mubr.f32.gmra.mrb[0].mxu0 %v522
  %v619 = vpop.f32.mrb[0].mxu0
  %v620 = vadd.f32 %v507, %v619
  %v621 = vpop.f32.mrb[0].mxu0
  %622 = vmatprep.mubr.f32.mxu0 0.0
  %623 = vmatmul.mubr.f32.gmra.mrb[0].mxu0 %v525
  %v624 = vpop.f32.mrb[0].mxu0
  %v625 = vadd.f32 %v507, %v624
  %v626 = vpop.f32.mrb[0].mxu0
  %627 = vmatprep.mubr.f32.mxu0 0.0
  %628 = vmatmul.mubr.f32.gmra.mrb[0].mxu0 %v528
  %v629 = vpop.f32.mrb[0].mxu0
  %v630 = vadd.f32 %v507, %v629
  %v631 = vpop.f32.mrb[0].mxu0
  %632 = vmatprep.mubr.f32.mxu0 0.0
  %633 = vmatmul.mubr.f32.gmra.mrb[0].mxu0 %v531
  %v634 = vpop.f32.mrb[0].mxu0
  %v635 = vadd.f32 %v507, %v634
  %v636 = vpop.f32.mrb[0].mxu0
  %637 = vdwg.mxu0
  %vm638 = vcmask 130048
  %639 = vst.msk [vmem:[%s9] sm:$0xff] %vm638, %v600
  %640 = vst.msk [vmem:[%s9 + $0x8] sm:$0xff] %vm638, %v605
  %641 = vst.msk [vmem:[%s9 + $0x10] sm:$0xff] %vm638, %v610
  %642 = vst.msk [vmem:[%s9 + $0x18] sm:$0xff] %vm638, %v615
  %643 = vst.msk [vmem:[%s9 + $0x20] sm:$0xff] %vm638, %v620
  %644 = vst.msk [vmem:[%s9 + $0x28] sm:$0xff] %vm638, %v625
  %645 = vst.msk [vmem:[%s9 + $0x30] sm:$0xff] %vm638, %v630
  %646 = vst.msk [vmem:[%s9 + $0x38] sm:$0xff] %vm638, %v635
  // Predicated region
  $region38: #{tpu_custom_call.1} parent=0 // pred_check
    _
  $region39: #{tpu_custom_call.1} parent=0 // pred_check_branch
    %648 = sbr.rel (0) target = $region41
  $region40: #{tpu_custom_call.1} parent=0 // pred_region
    _
  $region41: #{tpu_custom_call.1} parent=0 // pred_fallthru
    _
  // Predicated region
  $region42: #{tpu_custom_call.1} parent=0 // pred_check
    _
  $region43: #{tpu_custom_call.1} parent=0 // pred_check_branch
    %650 = sbr.rel (0) target = $region45
  $region44: #{tpu_custom_call.1} parent=0 // pred_region
    _
  $region45: #{tpu_custom_call.1} parent=0 // pred_fallthru
    _

</llo_original>
